<compile_context>
chip_gen: v5e
topology: v5e:2x2
jax: 0.10.0
libtpu: 0.0.40
codegen_flags: <defaults>
</compile_context>

<pallas_src>
import jax
import jax.numpy as jnp
from jax import lax
from jax.experimental import pallas as pl
from jax.experimental.pallas import tpu as pltpu


def sgnn_kernel(x_ref, w1_ref, b1_ref, w2_ref, b2_ref, w3_ref, b3_ref, o_ref):
    bb, N, F = x_ref.shape
    x = x_ref[...]                      # (bb, N, F)
    w1 = w1_ref[...]
    b1 = b1_ref[...]                    # (1, F)
    w2 = w2_ref[...]
    b2 = b2_ref[...]
    w3 = w3_ref[...]
    b3 = b3_ref[...]

    # ---- feed-forward (two stacked Linear layers), batched over bb*N rows ----
    # Leading-dim merge (16 % 8 == 0, last dim unchanged) is layout-preserving.
    x2 = x.reshape(bb * N, F)
    p2 = jnp.dot(x2, w1, preferred_element_type=jnp.float32) + b1
    p2 = jnp.dot(p2, w2, preferred_element_type=jnp.float32) + b2
    p = p2.reshape(bb, N, F)

    # ---- adjacency: a = p p^T per batch element (no explicit transpose) ----
    a = jnp.einsum('bnf,bmf->bnm', p, p,
                   preferred_element_type=jnp.float32)          # (bb, N, N)

    # softmax over last dim; relu(softmax) == softmax (non-negative), skipped.
    m = jnp.max(a, axis=-1, keepdims=True)
    e = jnp.exp(a - m)
    s = e * pl.reciprocal(jnp.sum(e, axis=-1, keepdims=True), approx=False)

    # R = s + I (kept implicit). rowsum(R) = rowsum(s) + 1 >= 1, so the
    # reference's isinf guard is dead code.
    dinv = lax.rsqrt(jnp.sum(s, axis=-1, keepdims=True) + 1.0)  # (bb, N, 1)

    # A @ x = D R D x = dinv * (s @ (dinv * x) + (dinv * x))
    # -> the two diagonal matmuls become cheap broadcast scalings.
    xs = dinv * x                                               # (bb, N, F)
    rx = jnp.einsum('bnm,bmf->bnf', s, xs,
                    preferred_element_type=jnp.float32) + xs    # R @ (D x)
    ax = dinv * rx                                              # D R D x

    # ---- output linear + relu, again batched over bb*N rows ----
    y = jnp.dot(ax.reshape(bb * N, F), w3,
                preferred_element_type=jnp.float32) + b3
    o_ref[...] = jnp.maximum(y, 0.0).reshape(bb, N, F)


def sgnn_forward(x, w1, b1, w2, b2, w3, b3):
    B, N, F = x.shape
    b1 = b1.reshape(1, F)
    b2 = b2.reshape(1, F)
    b3 = b3.reshape(1, F)

    # Two grid steps when B is even: one per v7x TensorCore, while each step
    # amortizes its ~0.35us pipeline overhead over B//2 batch elements
    # (single step otherwise). For very large B, cap the per-step block instead.
    grid_b = 2 if (B >= 2 and B % 2 == 0) else 1
    bb = B // grid_b

    weight_spec = lambda: pl.BlockSpec((F, F), lambda g: (0, 0))
    bias_spec = lambda: pl.BlockSpec((1, F), lambda g: (0, 0))

    return pl.pallas_call(
        sgnn_kernel,
        out_shape=jax.ShapeDtypeStruct((B, N, F), jnp.float32),
        grid_spec=pltpu.PrefetchScalarGridSpec(
            num_scalar_prefetch=0,
            grid=(grid_b,),
            in_specs=[
                pl.BlockSpec((bb, N, F), lambda g: (g, 0, 0)),
                weight_spec(), bias_spec(),
                weight_spec(), bias_spec(),
                weight_spec(), bias_spec(),
            ],
            out_specs=pl.BlockSpec((bb, N, F), lambda g: (g, 0, 0)),
        ),
        compiler_params=pltpu.CompilerParams(
            dimension_semantics=("parallel",)),
    )(x, w1, b1, w2, b2, w3, b3)


def sgnn_reference(x, w1, b1, w2, b2, w3, b3):
    """Pure-JAX reference mirroring the PyTorch forward."""
    p = jnp.matmul(x, w1) + b1
    p = jnp.matmul(p, w2) + b2
    a = jnp.matmul(p, jnp.swapaxes(p, -1, -2))
    R = jax.nn.relu(jax.nn.softmax(a, axis=-1)) + jnp.eye(x.shape[1], dtype=x.dtype)
    D = jnp.sum(R, axis=-1) ** (-0.5)
    D = jnp.where(jnp.isinf(D), 0.0, D)
    Dm = jnp.einsum('bi,ij->bij', D, jnp.eye(x.shape[1], dtype=x.dtype))
    A = jnp.matmul(jnp.matmul(Dm, R), Dm)
    return jax.nn.relu(jnp.matmul(jnp.matmul(A, x), w3) + b3)


if __name__ == "__main__":
    B, N, F = 8, 16, 32   # batch, nodes, outfea (small, exercises bb=4 per step)

    key = jax.random.PRNGKey(0)
    kx, k1, k2, k3, kb1, kb2, kb3 = jax.random.split(key, 7)

    x = jax.random.normal(kx, (B, N, F), dtype=jnp.float32)
    scale = 1.0 / jnp.sqrt(jnp.float32(F))
    w1 = jax.random.uniform(k1, (F, F), jnp.float32, -scale, scale)
    w2 = jax.random.uniform(k2, (F, F), jnp.float32, -scale, scale)
    w3 = jax.random.uniform(k3, (F, F), jnp.float32, -scale, scale)
    b1 = jax.random.uniform(kb1, (F,), jnp.float32, -scale, scale)
    b2 = jax.random.uniform(kb2, (F,), jnp.float32, -scale, scale)
    b3 = jax.random.uniform(kb3, (F,), jnp.float32, -scale, scale)

    out = sgnn_forward(x, w1, b1, w2, b2, w3, b3)
    out = jax.block_until_ready(out)

    ref = sgnn_reference(x, w1, b1, w2, b2, w3, b3)
    assert out.shape == (B, N, F)
    # Tolerance leaves room for the (mathematically exact) D R D refactoring,
    # which only changes fp association order relative to the reference.
    assert jnp.allclose(out, ref, atol=1e-4, rtol=1e-4), "mismatch vs reference"

    print("KERNEL_OK")
</pallas_src>

<mosaic_0001>
module attributes {stable_mosaic.version = 11 : i64} {
  func.func @sgnn_kernel(%arg0: i32, %arg1: memref<4x16x32xf32, #tpu.memory_space<vmem>>, %arg2: memref<32x32xf32, #tpu.memory_space<vmem>>, %arg3: memref<1x32xf32, #tpu.memory_space<vmem>>, %arg4: memref<32x32xf32, #tpu.memory_space<vmem>>, %arg5: memref<1x32xf32, #tpu.memory_space<vmem>>, %arg6: memref<32x32xf32, #tpu.memory_space<vmem>>, %arg7: memref<1x32xf32, #tpu.memory_space<vmem>>, %arg8: memref<4x16x32xf32, #tpu.memory_space<vmem>>) attributes {dimension_semantics = [#tpu.dimension_semantics<parallel>], iteration_bounds = array<i64: 2>, scalar_prefetch = 0 : i64, scratch_operands = 0 : i64, tpu.core_type = #tpu.core_type<tc>, window_params = [{transform_indices = @transform_0, window_bounds = array<i64: 4, 16, 32>}, {pipeline_mode = #tpu.pipeline_mode<synchronous>, transform_indices = @transform_1, window_bounds = array<i64: 32, 32>}, {pipeline_mode = #tpu.pipeline_mode<synchronous>, transform_indices = @transform_2, window_bounds = array<i64: 1, 32>}, {pipeline_mode = #tpu.pipeline_mode<synchronous>, transform_indices = @transform_3, window_bounds = array<i64: 32, 32>}, {pipeline_mode = #tpu.pipeline_mode<synchronous>, transform_indices = @transform_4, window_bounds = array<i64: 1, 32>}, {pipeline_mode = #tpu.pipeline_mode<synchronous>, transform_indices = @transform_5, window_bounds = array<i64: 32, 32>}, {pipeline_mode = #tpu.pipeline_mode<synchronous>, transform_indices = @transform_6, window_bounds = array<i64: 1, 32>}, {transform_indices = @transform_7, window_bounds = array<i64: 4, 16, 32>}]} {
    %c0 = arith.constant 0 : index
    %c0_0 = arith.constant 0 : index
    %c0_1 = arith.constant 0 : index
    %0 = vector.load %arg1[%c0, %c0_0, %c0_1] : memref<4x16x32xf32, #tpu.memory_space<vmem>>, vector<4x16x32xf32>
    %c0_2 = arith.constant 0 : index
    %c0_3 = arith.constant 0 : index
    %1 = vector.load %arg2[%c0_2, %c0_3] : memref<32x32xf32, #tpu.memory_space<vmem>>, vector<32x32xf32>
    %c0_4 = arith.constant 0 : index
    %c0_5 = arith.constant 0 : index
    %2 = vector.load %arg3[%c0_4, %c0_5] : memref<1x32xf32, #tpu.memory_space<vmem>>, vector<1x32xf32>
    %c0_6 = arith.constant 0 : index
    %c0_7 = arith.constant 0 : index
    %3 = vector.load %arg4[%c0_6, %c0_7] : memref<32x32xf32, #tpu.memory_space<vmem>>, vector<32x32xf32>
    %c0_8 = arith.constant 0 : index
    %c0_9 = arith.constant 0 : index
    %4 = vector.load %arg5[%c0_8, %c0_9] : memref<1x32xf32, #tpu.memory_space<vmem>>, vector<1x32xf32>
    %c0_10 = arith.constant 0 : index
    %c0_11 = arith.constant 0 : index
    %5 = vector.load %arg6[%c0_10, %c0_11] : memref<32x32xf32, #tpu.memory_space<vmem>>, vector<32x32xf32>
    %c0_12 = arith.constant 0 : index
    %c0_13 = arith.constant 0 : index
    %6 = vector.load %arg7[%c0_12, %c0_13] : memref<1x32xf32, #tpu.memory_space<vmem>>, vector<1x32xf32>
    %7 = vector.shape_cast %0 : vector<4x16x32xf32> to vector<64x32xf32>
    %cst = arith.constant dense<0.000000e+00> : vector<64x32xf32>
    %8 = tpu.matmul %7, %1, %cst {dimension_numbers = #tpu.dot_dimension_numbers<[1], [0], [0], [1], [0, 0, 1, 1], [], []>} : vector<64x32xf32>, vector<32x32xf32>, vector<64x32xf32> -> vector<64x32xf32>
    %9 = vector.broadcast %2 : vector<1x32xf32> to vector<64x32xf32>
    %10 = arith.addf %8, %9 : vector<64x32xf32>
    %cst_14 = arith.constant dense<0.000000e+00> : vector<64x32xf32>
    %11 = tpu.matmul %10, %3, %cst_14 {dimension_numbers = #tpu.dot_dimension_numbers<[1], [0], [0], [1], [0, 0, 1, 1], [], []>} : vector<64x32xf32>, vector<32x32xf32>, vector<64x32xf32> -> vector<64x32xf32>
    %12 = vector.broadcast %4 : vector<1x32xf32> to vector<64x32xf32>
    %13 = arith.addf %11, %12 : vector<64x32xf32>
    %14 = vector.shape_cast %13 : vector<64x32xf32> to vector<4x16x32xf32>
    "tpu.trace_start"() <{level = 10 : i32, message = "bnf,bmf->bnm"}> : () -> ()
    %cst_15 = arith.constant dense<0.000000e+00> : vector<4x16x16xf32>
    %15 = tpu.matmul %14, %14, %cst_15 {dimension_numbers = #tpu.dot_dimension_numbers<[2], [2], [1], [1], [0, 0, 0, 1, 1, 1], [0], [0]>} : vector<4x16x32xf32>, vector<4x16x32xf32>, vector<4x16x16xf32> -> vector<4x16x16xf32>
    "tpu.trace_stop"() : () -> ()
    %cst_16 = arith.constant dense<0xFF800000> : vector<4x16xf32>
    %16 = vector.multi_reduction <maximumf>, %15, %cst_16 [2] : vector<4x16x16xf32> to vector<4x16xf32>
    %17 = vector.shape_cast %16 : vector<4x16xf32> to vector<4x16x1xf32>
    %18 = vector.broadcast %17 : vector<4x16x1xf32> to vector<4x16x16xf32>
    %19 = arith.subf %15, %18 : vector<4x16x16xf32>
    %20 = math.exp %19 : vector<4x16x16xf32>
    %cst_17 = arith.constant dense<0.000000e+00> : vector<4x16xf32>
    %21 = vector.multi_reduction <add>, %20, %cst_17 [2] : vector<4x16x16xf32> to vector<4x16xf32>
    %22 = vector.shape_cast %21 : vector<4x16xf32> to vector<4x16x1xf32>
    %23 = tpu.reciprocal %22 : vector<4x16x1xf32> -> vector<4x16x1xf32>
    %24 = vector.broadcast %23 : vector<4x16x1xf32> to vector<4x16x16xf32>
    %25 = arith.mulf %20, %24 : vector<4x16x16xf32>
    %cst_18 = arith.constant dense<0.000000e+00> : vector<4x16xf32>
    %26 = vector.multi_reduction <add>, %25, %cst_18 [2] : vector<4x16x16xf32> to vector<4x16xf32>
    %27 = vector.shape_cast %26 : vector<4x16xf32> to vector<4x16x1xf32>
    %cst_19 = arith.constant 1.000000e+00 : f32
    %28 = vector.broadcast %cst_19 : f32 to vector<4x16x1xf32>
    %29 = arith.addf %27, %28 : vector<4x16x1xf32>
    %30 = math.rsqrt %29 : vector<4x16x1xf32>
    %31 = vector.broadcast %30 : vector<4x16x1xf32> to vector<4x16x32xf32>
    %32 = arith.mulf %31, %0 : vector<4x16x32xf32>
    "tpu.trace_start"() <{level = 10 : i32, message = "bnm,bmf->bnf"}> : () -> ()
    %cst_20 = arith.constant dense<0.000000e+00> : vector<4x16x32xf32>
    %33 = tpu.matmul %25, %32, %cst_20 {dimension_numbers = #tpu.dot_dimension_numbers<[2], [1], [1], [2], [0, 0, 0, 1, 1, 2], [0], [0]>} : vector<4x16x16xf32>, vector<4x16x32xf32>, vector<4x16x32xf32> -> vector<4x16x32xf32>
    "tpu.trace_stop"() : () -> ()
    %34 = arith.addf %33, %32 : vector<4x16x32xf32>
    %35 = vector.broadcast %30 : vector<4x16x1xf32> to vector<4x16x32xf32>
    %36 = arith.mulf %35, %34 : vector<4x16x32xf32>
    %37 = vector.shape_cast %36 : vector<4x16x32xf32> to vector<64x32xf32>
    %cst_21 = arith.constant dense<0.000000e+00> : vector<64x32xf32>
    %38 = tpu.matmul %37, %5, %cst_21 {dimension_numbers = #tpu.dot_dimension_numbers<[1], [0], [0], [1], [0, 0, 1, 1], [], []>} : vector<64x32xf32>, vector<32x32xf32>, vector<64x32xf32> -> vector<64x32xf32>
    %39 = vector.broadcast %6 : vector<1x32xf32> to vector<64x32xf32>
    %40 = arith.addf %38, %39 : vector<64x32xf32>
    %cst_22 = arith.constant 0.000000e+00 : f32
    %41 = vector.broadcast %cst_22 : f32 to vector<64x32xf32>
    %42 = arith.maximumf %40, %41 : vector<64x32xf32>
    %43 = vector.shape_cast %42 : vector<64x32xf32> to vector<4x16x32xf32>
    %c0_23 = arith.constant 0 : index
    %c0_24 = arith.constant 0 : index
    %c0_25 = arith.constant 0 : index
    %44 = vector.load %arg8[%c0_23, %c0_24, %c0_25] : memref<4x16x32xf32, #tpu.memory_space<vmem>>, vector<4x16x32xf32>
    tpu.vector_store %arg8[%c0_23, %c0_24, %c0_25], %43 {strides = array<i32>} : memref<4x16x32xf32, #tpu.memory_space<vmem>>, vector<4x16x32xf32>,
    return
  }
  func.func @transform_0(%arg0: i32) -> (i32, i32, i32) {
    %c0_i32 = arith.constant 0 : i32
    %c0_i32_0 = arith.constant 0 : i32
    %c0_i32_1 = arith.constant 0 : i32
    return %arg0, %c0_i32, %c0_i32_0 : i32, i32, i32
  }
  func.func @transform_1(%arg0: i32) -> (i32, i32) {
    %c0_i32 = arith.constant 0 : i32
    %c0_i32_0 = arith.constant 0 : i32
    %c0_i32_1 = arith.constant 0 : i32
    return %c0_i32, %c0_i32_0 : i32, i32
  }
  func.func @transform_2(%arg0: i32) -> (i32, i32) {
    %c0_i32 = arith.constant 0 : i32
    %c0_i32_0 = arith.constant 0 : i32
    %c0_i32_1 = arith.constant 0 : i32
    return %c0_i32, %c0_i32_0 : i32, i32
  }
  func.func @transform_3(%arg0: i32) -> (i32, i32) {
    %c0_i32 = arith.constant 0 : i32
    %c0_i32_0 = arith.constant 0 : i32
    %c0_i32_1 = arith.constant 0 : i32
    return %c0_i32, %c0_i32_0 : i32, i32
  }
  func.func @transform_4(%arg0: i32) -> (i32, i32) {
    %c0_i32 = arith.constant 0 : i32
    %c0_i32_0 = arith.constant 0 : i32
    %c0_i32_1 = arith.constant 0 : i32
    return %c0_i32, %c0_i32_0 : i32, i32
  }
  func.func @transform_5(%arg0: i32) -> (i32, i32) {
    %c0_i32 = arith.constant 0 : i32
    %c0_i32_0 = arith.constant 0 : i32
    %c0_i32_1 = arith.constant 0 : i32
    return %c0_i32, %c0_i32_0 : i32, i32
  }
  func.func @transform_6(%arg0: i32) -> (i32, i32) {
    %c0_i32 = arith.constant 0 : i32
    %c0_i32_0 = arith.constant 0 : i32
    %c0_i32_1 = arith.constant 0 : i32
    return %c0_i32, %c0_i32_0 : i32, i32
  }
  func.func @transform_7(%arg0: i32) -> (i32, i32, i32) {
    %c0_i32 = arith.constant 0 : i32
    %c0_i32_0 = arith.constant 0 : i32
    %c0_i32_1 = arith.constant 0 : i32
    return %arg0, %c0_i32, %c0_i32_0 : i32, i32, i32
  }
}

</mosaic_0001>

<llo_original>
// kernel: tpu_custom_call.1
$region0: #{tpu_custom_call.1}
  #allocation0 [shape = 'u32[]', space=smem, size = 0x4, offset = 0x4, fixed_abs, tag = 'smem constant byte address 0x4 - core index']
  #allocation1 [shape = 'u32[72,128]{1,0:T(1,128)}', space=vmem, size = 0x9000, scoped, tag = 'internal scratch']
  %s0 = inlined_call_operand.hbm [shape: f32[8,16,32], index: 0, kind: input, shape index: {}]
  %s1 = inlined_call_operand.hbm [shape: f32[32,32], index: 1, kind: input, shape index: {}]
  %s2 = inlined_call_operand.vmem [shape: f32[1,32], index: 2, kind: input, shape index: {}]
  %s3 = inlined_call_operand.hbm [shape: f32[32,32], index: 3, kind: input, shape index: {}]
  %s4 = inlined_call_operand.vmem [shape: f32[1,32], index: 4, kind: input, shape index: {}]
  %s5 = inlined_call_operand.hbm [shape: f32[32,32], index: 5, kind: input, shape index: {}]
  %s6 = inlined_call_operand.vmem [shape: f32[1,32], index: 6, kind: input, shape index: {}]
  %s7 = inlined_call_operand.hbm [shape: f32[8,16,32], index: 7, kind: output, shape index: {}]
  %s8 = sld [smem:[#allocation0]]
  $region77: #{tpu_custom_call.1} parent=0
    _
  %s10 = ssub.s32 1, %s8
  %s11 = scalar_select 0, %s10, %s8
  $region1: #{tpu_custom_call.1} parent=0
    #allocation2 [shape = 'u8[65536]{0}', space=vmem, size = 0x10000, scoped, tag = 'input window, operand 0']
    #allocation3 [shape = 's32[2]{0}', space=sflag, size = 0x8, scoped, tag = 'scoped memory for tpu_custom_call.1']
    #allocation4 [shape = 's32[2]{0}', space=sflag, size = 0x8, scoped, tag = 'scoped memory for tpu_custom_call.1']
    #allocation5 [shape = 'u8[16384]{0}', space=vmem, size = 0x4000, scoped, tag = 'input window, operand 1, single buffered']
    #allocation6 [shape = 's32[1]{0}', space=sflag, size = 0x4, scoped, tag = 'scoped memory for tpu_custom_call.1']
    #allocation7 [shape = 'u8[16384]{0}', space=vmem, size = 0x4000, scoped, tag = 'input window, operand 3, single buffered']
    #allocation8 [shape = 'u8[16384]{0}', space=vmem, size = 0x4000, scoped, tag = 'input window, operand 5, single buffered']
    #allocation9 [shape = 's32[1]{0}', space=sflag, size = 0x4, scoped, tag = 'scoped memory for tpu_custom_call.1']
    #allocation10 [shape = 'u8[65536]{0}', space=vmem, size = 0x10000, scoped, tag = 'output window, operand 0']
    %12 = vsyncpa [#allocation3], 0
    %s13 = scalar_lea.sflag [#allocation3], 1
    %14 = vsyncpa %s13, 0
    %15 = vsyncpa [#allocation6], 0
    %16 = vsyncpa [#allocation9], 0
    %17 = vsyncpa [#allocation4], 0
    %s18 = scalar_lea.sflag [#allocation4], 1
    %19 = vsyncpa %s18, 0
    loop: start=0, step=1, limit=4
    $region2: #{tpu_custom_call.1} parent=1 // loop_pre_header
      _
    $region3: #{tpu_custom_call.1} parent=1 // loop_header
      %s21 = sphi 0, %s25
      %p22 = scmp.ge.s32.totalorder %s21, 4
      %s31 = sphi 0, %s33
      %s34 = sphi 0, %s31
      %s35 = sphi 0, %s34
      %s51 = sphi 0, %s35
      %s55 = sphi 0, %s55
      %s57 = sphi 0, %s55
      %s58 = sphi 0, %s57
      %s72 = sphi 0, %s58
      %s76 = sphi 0, %s76
      %s78 = sphi 0, %s76
      %s79 = sphi 0, %s78
      %s93 = sphi 0, %s79
      %s97 = sphi 0, %s97
      %s99 = sphi 0, %s97
      %s100 = sphi 0, %s99
      %s114 = sphi 0, %s100
      %s118 = sphi 0, %s118
      %s120 = sphi 0, %s118
      %s121 = sphi 0, %s120
      %s135 = sphi 0, %s121
      %s139 = sphi 0, %s139
      %s141 = sphi 0, %s139
      %s142 = sphi 0, %s141
      %s156 = sphi 0, %s142
      %s160 = sphi 0, %s160
      %s162 = sphi 0, %s160
      %s163 = sphi 0, %s162
      %s177 = sphi 0, %s163
      %s183 = sphi 0, %s185
      %s186 = sphi 0, %s183
      %s187 = sphi 0, %s186
      %s203 = sphi 0, %s187
    $region4: #{tpu_custom_call.1} parent=1 // loop_header_branch
      %24 = sbr.rel (%p22) target = $region8
    $region5: #{tpu_custom_call.1} parent=1 // loop_body
      %s26 = ssub.s32 %s21, 1
      %s27 = ssub.s32 %s21, 2
      %s28 = sadd.s32 %s21, 1
      %s29 = ssub.s32 %s21, %s28
      %p30 = scmp.eq.s32.totalorder %s29, 0
      %s32 = sadd.s32 %s31, 1
      %s33 = scalar_select %p30, %s31, %s32
      %p36 = pneg %p30
      %p37 = scmp.eq.s32.totalorder %s21, 1
      %p38 = por %p36, %p37
      %p39 = scmp.ne.s32.totalorder %s31, %s34
      %p40 = scmp.eq.s32.totalorder %s21, 0
      %p41 = por %p39, %p40
      %p42 = scmp.ne.s32.totalorder %s31, %s34
      %p43 = scmp.eq.s32.totalorder %s26, 1
      %p44 = por %p42, %p43
      %p45 = scmp.ne.s32.totalorder %s34, %s35
      %p46 = scmp.eq.s32.totalorder %s26, 0
      %p47 = por %p45, %p46
      %p48 = scmp.ne.s32.totalorder %s34, %s35
      %p49 = scmp.eq.s32.totalorder %s27, 1
      %p50 = por %p48, %p49
      %p52 = scmp.ne.s32.totalorder %s35, %s51
      %p53 = scmp.eq.s32.totalorder %s27, 0
      %p54 = por %p52, %p53
      %s56 = sadd.s32 %s55, 1
      %p59 = scmp.eq.s32.totalorder %s21, 1
      %p60 = scmp.ne.s32.totalorder %s55, %s57
      %p61 = scmp.eq.s32.totalorder %s21, 0
      %p62 = por %p60, %p61
      %p63 = scmp.ne.s32.totalorder %s55, %s57
      %p64 = scmp.eq.s32.totalorder %s26, 1
      %p65 = por %p63, %p64
      %p66 = scmp.ne.s32.totalorder %s57, %s58
      %p67 = scmp.eq.s32.totalorder %s26, 0
      %p68 = por %p66, %p67
      %p69 = scmp.ne.s32.totalorder %s57, %s58
      %p70 = scmp.eq.s32.totalorder %s27, 1
      %p71 = por %p69, %p70
      %p73 = scmp.ne.s32.totalorder %s58, %s72
      %p74 = scmp.eq.s32.totalorder %s27, 0
      %p75 = por %p73, %p74
      %s77 = sadd.s32 %s76, 1
      %p80 = scmp.eq.s32.totalorder %s21, 1
      %p81 = scmp.ne.s32.totalorder %s76, %s78
      %p82 = scmp.eq.s32.totalorder %s21, 0
      %p83 = por %p81, %p82
      %p84 = scmp.ne.s32.totalorder %s76, %s78
      %p85 = scmp.eq.s32.totalorder %s26, 1
      %p86 = por %p84, %p85
      %p87 = scmp.ne.s32.totalorder %s78, %s79
      %p88 = scmp.eq.s32.totalorder %s26, 0
      %p89 = por %p87, %p88
      %p90 = scmp.ne.s32.totalorder %s78, %s79
      %p91 = scmp.eq.s32.totalorder %s27, 1
      %p92 = por %p90, %p91
      %p94 = scmp.ne.s32.totalorder %s79, %s93
      %p95 = scmp.eq.s32.totalorder %s27, 0
      %p96 = por %p94, %p95
      %s98 = sadd.s32 %s97, 1
      %p101 = scmp.eq.s32.totalorder %s21, 1
      %p102 = scmp.ne.s32.totalorder %s97, %s99
      %p103 = scmp.eq.s32.totalorder %s21, 0
      %p104 = por %p102, %p103
      %p105 = scmp.ne.s32.totalorder %s97, %s99
      %p106 = scmp.eq.s32.totalorder %s26, 1
      %p107 = por %p105, %p106
      %p108 = scmp.ne.s32.totalorder %s99, %s100
      %p109 = scmp.eq.s32.totalorder %s26, 0
      %p110 = por %p108, %p109
      %p111 = scmp.ne.s32.totalorder %s99, %s100
      %p112 = scmp.eq.s32.totalorder %s27, 1
      %p113 = por %p111, %p112
      %p115 = scmp.ne.s32.totalorder %s100, %s114
      %p116 = scmp.eq.s32.totalorder %s27, 0
      %p117 = por %p115, %p116
      %s119 = sadd.s32 %s118, 1
      %p122 = scmp.eq.s32.totalorder %s21, 1
      %p123 = scmp.ne.s32.totalorder %s118, %s120
      %p124 = scmp.eq.s32.totalorder %s21, 0
      %p125 = por %p123, %p124
      %p126 = scmp.ne.s32.totalorder %s118, %s120
      %p127 = scmp.eq.s32.totalorder %s26, 1
      %p128 = por %p126, %p127
      %p129 = scmp.ne.s32.totalorder %s120, %s121
      %p130 = scmp.eq.s32.totalorder %s26, 0
      %p131 = por %p129, %p130
      %p132 = scmp.ne.s32.totalorder %s120, %s121
      %p133 = scmp.eq.s32.totalorder %s27, 1
      %p134 = por %p132, %p133
      %p136 = scmp.ne.s32.totalorder %s121, %s135
      %p137 = scmp.eq.s32.totalorder %s27, 0
      %p138 = por %p136, %p137
      %s140 = sadd.s32 %s139, 1
      %p143 = scmp.eq.s32.totalorder %s21, 1
      %p144 = scmp.ne.s32.totalorder %s139, %s141
      %p145 = scmp.eq.s32.totalorder %s21, 0
      %p146 = por %p144, %p145
      %p147 = scmp.ne.s32.totalorder %s139, %s141
      %p148 = scmp.eq.s32.totalorder %s26, 1
      %p149 = por %p147, %p148
      %p150 = scmp.ne.s32.totalorder %s141, %s142
      %p151 = scmp.eq.s32.totalorder %s26, 0
      %p152 = por %p150, %p151
      %p153 = scmp.ne.s32.totalorder %s141, %s142
      %p154 = scmp.eq.s32.totalorder %s27, 1
      %p155 = por %p153, %p154
      %p157 = scmp.ne.s32.totalorder %s142, %s156
      %p158 = scmp.eq.s32.totalorder %s27, 0
      %p159 = por %p157, %p158
      %s161 = sadd.s32 %s160, 1
      %p164 = scmp.eq.s32.totalorder %s21, 1
      %p165 = scmp.ne.s32.totalorder %s160, %s162
      %p166 = scmp.eq.s32.totalorder %s21, 0
      %p167 = por %p165, %p166
      %p168 = scmp.ne.s32.totalorder %s160, %s162
      %p169 = scmp.eq.s32.totalorder %s26, 1
      %p170 = por %p168, %p169
      %p171 = scmp.ne.s32.totalorder %s162, %s163
      %p172 = scmp.eq.s32.totalorder %s26, 0
      %p173 = por %p171, %p172
      %p174 = scmp.ne.s32.totalorder %s162, %s163
      %p175 = scmp.eq.s32.totalorder %s27, 1
      %p176 = por %p174, %p175
      %p178 = scmp.ne.s32.totalorder %s163, %s177
      %p179 = scmp.eq.s32.totalorder %s27, 0
      %p180 = por %p178, %p179
      %s181 = ssub.s32 %s21, %s28
      %p182 = scmp.eq.s32.totalorder %s181, 0
      %s184 = sadd.s32 %s183, 1
      %s185 = scalar_select %p182, %s183, %s184
      %p188 = pneg %p182
      %p189 = scmp.eq.s32.totalorder %s21, 1
      %p190 = por %p188, %p189
      %p191 = scmp.ne.s32.totalorder %s183, %s186
      %p192 = scmp.eq.s32.totalorder %s21, 0
      %p193 = por %p191, %p192
      %p194 = scmp.ne.s32.totalorder %s183, %s186
      %p195 = scmp.eq.s32.totalorder %s26, 1
      %p196 = por %p194, %p195
      %p197 = scmp.ne.s32.totalorder %s186, %s187
      %p198 = scmp.eq.s32.totalorder %s26, 0
      %p199 = por %p197, %p198
      %p200 = scmp.ne.s32.totalorder %s186, %s187
      %p201 = scmp.eq.s32.totalorder %s27, 1
      %p202 = por %p200, %p201
      %p204 = scmp.ne.s32.totalorder %s187, %s203
      %p205 = scmp.eq.s32.totalorder %s27, 0
      %p206 = por %p204, %p205
      %p207 = scmp.le.s32.totalorder 1, %s21
      %p208 = scmp.lt.s32.totalorder %s21, 3
      %p209 = pnand %p207, %p208
      %p210 = pneg %p209
      // Predicated region
      $region9: #{tpu_custom_call.1} parent=5 // pred_check
        _
      $region10: #{tpu_custom_call.1} parent=5 // pred_check_branch
        %212 = sbr.rel (%p209) target = $region12
      $region11: #{tpu_custom_call.1} parent=5 // pred_region
        %s213 = ssub.s32 %s21, 1
        // Predicated region
        $region13: #{tpu_custom_call.1} parent=11 // pred_check
          %p214 = pneg %p68
        $region14: #{tpu_custom_call.1} parent=11 // pred_check_branch
          %216 = sbr.rel (%p214) target = $region16
        $region15: #{tpu_custom_call.1} parent=11 // pred_region
          %218 = vsyncadd [#allocation6], 0
          %s219 = sshll.u32 %s1, 4
          %s220 = int_to_ptr.hbm [resolvable:$true] %s219
          %s221 = sshll.u32 [#allocation5], 4
          %s222 = int_to_ptr.vmem [resolvable:$true] %s221
          %227 = dma.hbm_to_vmem [thread:$0]  %s220, 512, %s222, [#allocation6], 128, 128, 8
        $region16: #{tpu_custom_call.1} parent=11 // pred_fallthru
          _
        // Predicated region
        $region17: #{tpu_custom_call.1} parent=11 // pred_check
          %p228 = pneg %p89
        $region18: #{tpu_custom_call.1} parent=11 // pred_check_branch
          %230 = sbr.rel (%p228) target = $region20
        $region19: #{tpu_custom_call.1} parent=11 // pred_region
          _
        $region20: #{tpu_custom_call.1} parent=11 // pred_fallthru
          _
        // Predicated region
        $region21: #{tpu_custom_call.1} parent=11 // pred_check
          %p231 = pneg %p110
        $region22: #{tpu_custom_call.1} parent=11 // pred_check_branch
          %233 = sbr.rel (%p231) target = $region24
        $region23: #{tpu_custom_call.1} parent=11 // pred_region
          %235 = vsyncadd [#allocation6], 0
          %s236 = sshll.u32 %s3, 4
          %s237 = int_to_ptr.hbm [resolvable:$true] %s236
          %s238 = sshll.u32 [#allocation7], 4
          %s239 = int_to_ptr.vmem [resolvable:$true] %s238
          %244 = dma.hbm_to_vmem [thread:$0]  %s237, 512, %s239, [#allocation6], 128, 128, 8
        $region24: #{tpu_custom_call.1} parent=11 // pred_fallthru
          _
        // Predicated region
        $region25: #{tpu_custom_call.1} parent=11 // pred_check
          %p245 = pneg %p131
        $region26: #{tpu_custom_call.1} parent=11 // pred_check_branch
          %247 = sbr.rel (%p245) target = $region28
        $region27: #{tpu_custom_call.1} parent=11 // pred_region
          _
        $region28: #{tpu_custom_call.1} parent=11 // pred_fallthru
          _
        // Predicated region
        $region29: #{tpu_custom_call.1} parent=11 // pred_check
          %p248 = pneg %p152
        $region30: #{tpu_custom_call.1} parent=11 // pred_check_branch
          %250 = sbr.rel (%p248) target = $region32
        $region31: #{tpu_custom_call.1} parent=11 // pred_region
          %252 = vsyncadd [#allocation9], 0
          %s253 = sshll.u32 %s5, 4
          %s254 = int_to_ptr.hbm [resolvable:$true] %s253
          %s255 = sshll.u32 [#allocation8], 4
          %s256 = int_to_ptr.vmem [resolvable:$true] %s255
          %261 = dma.hbm_to_vmem [thread:$0]  %s254, 512, %s256, [#allocation9], 128, 128, 8
        $region32: #{tpu_custom_call.1} parent=11 // pred_fallthru
          _
        // Predicated region
        $region33: #{tpu_custom_call.1} parent=11 // pred_check
          %p262 = pneg %p173
        $region34: #{tpu_custom_call.1} parent=11 // pred_check_branch
          %264 = sbr.rel (%p262) target = $region36
        $region35: #{tpu_custom_call.1} parent=11 // pred_region
          _
        $region36: #{tpu_custom_call.1} parent=11 // pred_fallthru
          _
      $region12: #{tpu_custom_call.1} parent=5 // pred_fallthru
        _
      %p265 = scmp.lt.s32.totalorder %s21, 2
      // Predicated region
      $region37: #{tpu_custom_call.1} parent=5 // pred_check
        %p266 = pneg %p265
      $region38: #{tpu_custom_call.1} parent=5 // pred_check_branch
        %268 = sbr.rel (%p266) target = $region40
      $region39: #{tpu_custom_call.1} parent=5 // pred_region
        // Predicated region
        $region41: #{tpu_custom_call.1} parent=39 // pred_check
          %p269 = pneg %p41
        $region42: #{tpu_custom_call.1} parent=39 // pred_check_branch
          %271 = sbr.rel (%p269) target = $region44
        $region43: #{tpu_custom_call.1} parent=39 // pred_region
          %s272 = sand.u32 %s31, 1
          %s273 = scalar_lea.sflag [#allocation3], %s272
          %s274 = sand.u32 %s31, 1
          %s275 = smul.addr %s274, 64
          %s276 = scalar_lea.vmem [#allocation2], %s275
          %s277 = smul.u32 4, %s21
          %279 = vsyncadd %s273, 0
          %s280 = smul.addr %s277, 2
          %s281 = smul.addr %s280, 8
          %s282 = scalar_lea.hbm %s0, %s281
          %s283 = sshll.u32 %s282, 4
          %s284 = int_to_ptr.hbm [resolvable:$true] %s283
          %s285 = sshll.u32 %s276, 4
          %s286 = int_to_ptr.vmem [resolvable:$true] %s285
          %291 = dma.hbm_to_vmem [thread:$0]  %s284, 1024, %s286, %s273, 128, 128, 8
        $region44: #{tpu_custom_call.1} parent=39 // pred_fallthru
          _
      $region40: #{tpu_custom_call.1} parent=5 // pred_fallthru
        _
      %p292 = scmp.le.s32.totalorder 1, %s21
      %p293 = scmp.lt.s32.totalorder %s21, 3
      %p294 = pnand %p292, %p293
      %p295 = pneg %p294
      // Predicated region
      $region45: #{tpu_custom_call.1} parent=5 // pred_check
        _
      $region46: #{tpu_custom_call.1} parent=5 // pred_check_branch
        %297 = sbr.rel (%p294) target = $region48
      $region47: #{tpu_custom_call.1} parent=5 // pred_region
        %s298 = ssub.s32 %s21, 1
        %s299 = sand.u32 %s34, 1
        %s300 = scalar_lea.sflag [#allocation3], %s299
        %s301 = sand.u32 %s34, 1
        %s302 = smul.addr %s301, 64
        %s303 = scalar_lea.vmem [#allocation2], %s302
        // Predicated region
        $region49: #{tpu_custom_call.1} parent=47 // pred_check
          %p304 = pneg %p47
        $region50: #{tpu_custom_call.1} parent=47 // pred_check_branch
          %306 = sbr.rel (%p304) target = $region52
        $region51: #{tpu_custom_call.1} parent=47 // pred_region
          %308 = dma.done %s300, 1024
        $region52: #{tpu_custom_call.1} parent=47 // pred_fallthru
          _
        // Predicated region
        $region53: #{tpu_custom_call.1} parent=47 // pred_check
          %p309 = pneg %p68
        $region54: #{tpu_custom_call.1} parent=47 // pred_check_branch
          %311 = sbr.rel (%p309) target = $region56
        $region55: #{tpu_custom_call.1} parent=47 // pred_region
          %313 = dma.done [#allocation6], 512
        $region56: #{tpu_custom_call.1} parent=47 // pred_fallthru
          _
        // Predicated region
        $region57: #{tpu_custom_call.1} parent=47 // pred_check
          %p314 = pneg %p110
        $region58: #{tpu_custom_call.1} parent=47 // pred_check_branch
          %316 = sbr.rel (%p314) target = $region60
        $region59: #{tpu_custom_call.1} parent=47 // pred_region
          %318 = dma.done [#allocation6], 512
        $region60: #{tpu_custom_call.1} parent=47 // pred_fallthru
          _
        // Predicated region
        $region61: #{tpu_custom_call.1} parent=47 // pred_check
          %p319 = pneg %p152
        $region62: #{tpu_custom_call.1} parent=47 // pred_check_branch
          %321 = sbr.rel (%p319) target = $region64
        $region63: #{tpu_custom_call.1} parent=47 // pred_region
          %323 = dma.done [#allocation9], 512
        $region64: #{tpu_custom_call.1} parent=47 // pred_fallthru
          _
        %s324 = sand.u32 %s34, 1
        %s325 = scalar_lea.sflag [#allocation3], %s324
        %s326 = sand.u32 %s34, 1
        %s327 = smul.addr %s326, 64
        %s328 = scalar_lea.vmem [#allocation2], %s327
        %p329 = pneg %p47
        %p330 = pneg %p44
        %p331 = pneg %p68
        %p332 = pneg %p65
        %p333 = pneg %p89
        %p334 = pneg %p86
        %p335 = pneg %p110
        %p336 = pneg %p107
        %p337 = pneg %p131
        %p338 = pneg %p128
        %p339 = pneg %p152
        %p340 = pneg %p149
        %p341 = pneg %p173
        %p342 = pneg %p170
        %p343 = pneg %p199
        %p344 = pneg %p196
        %s345 = sand.u32 %s186, 1
        %s346 = scalar_lea.sflag [#allocation4], %s345
        %s347 = sand.u32 %s186, 1
        %s348 = smul.addr %s347, 64
        %s349 = scalar_lea.vmem [#allocation10], %s348
        %s350 = smul.u32 4, %s26
        %s351 = smul.u32 4, %s26
        %v352 = vld [vmem:[%s303] sm:$0xff]
        %v353 = vld [vmem:[%s303 + $0x8] sm:$0xff]
        %v354 = vld [vmem:[%s303 + $0x10] sm:$0xff]
        %v355 = vld [vmem:[%s303 + $0x18] sm:$0xff]
        %v356 = vld [vmem:[%s303 + $0x20] sm:$0xff]
        %v357 = vld [vmem:[%s303 + $0x28] sm:$0xff]
        %v358 = vld [vmem:[%s303 + $0x30] sm:$0xff]
        %v359 = vld [vmem:[%s303 + $0x38] sm:$0xff]
        %v360 = vld [vmem:[#allocation5] sm:$0xff]
        %v361 = vld [vmem:[#allocation5 + $0x8] sm:$0xff]
        %v362 = vld [vmem:[#allocation5 + $0x10] sm:$0xff]
        %v363 = vld [vmem:[#allocation5 + $0x18] sm:$0xff]
        %v364 = vld [vmem:[%s2] sm:$0x1]
        %v365 = vld [vmem:[#allocation7] sm:$0xff]
        %v366 = vld [vmem:[#allocation7 + $0x8] sm:$0xff]
        %v367 = vld [vmem:[#allocation7 + $0x10] sm:$0xff]
        %v368 = vld [vmem:[#allocation7 + $0x18] sm:$0xff]
        %v369 = vld [vmem:[%s4] sm:$0x1]
        %v370 = vld [vmem:[#allocation8] sm:$0xff]
        %v371 = vld [vmem:[#allocation8 + $0x8] sm:$0xff]
        %v372 = vld [vmem:[#allocation8 + $0x10] sm:$0xff]
        %v373 = vld [vmem:[#allocation8 + $0x18] sm:$0xff]
        %v374 = vld [vmem:[%s6] sm:$0x1]
        %v376 = vperm.slane %v364, 0
        %vm378 = vcmask 261120
        %v380 = vsel %vm378, %v352, 0
        %v383 = vsel %vm378, %v353, 0
        %v386 = vsel %vm378, %v354, 0
        %v389 = vsel %vm378, %v355, 0
        %v392 = vsel %vm378, %v356, 0
        %v395 = vsel %vm378, %v357, 0
        %v398 = vsel %vm378, %v358, 0
        %v401 = vsel %vm378, %v359, 0
        %403 = vmatpush.msra.mxu0 0.0
        %404 = vmatpush.msra.mxu0 0.0
        %405 = vmatpush.msra.mxu0 0.0
        %406 = vmatpush.msra.mxu0 0.0
        %407 = vmatpush.msra.mxu0 0.0
        %408 = vmatpush.msra.mxu0 0.0
        %409 = vmatpush.msra.mxu0 0.0
        %410 = vmatpush.msra.mxu0 0.0
        %411 = vmatpush.msra.mxu0 0.0
        %412 = vmatpush.msra.mxu0 0.0
        %413 = vmatpush.msra.mxu0 0.0
        %414 = vmatpush.msra.mxu0 0.0
        %415 = vmatpush.msra.mxu0 %v363
        %416 = vmatpush.msra.mxu0 %v362
        %417 = vmatpush.msra.mxu0 %v361
        %418 = vmatpush.msra.mxu0 %v360
        %419 = vmatmul.f32.gmra.mxu0 %v380
        %v420 = vpop.f32.mrf.mxu0
        %v421 = vadd.f32 %v376, %v420
        %422 = vmatmul.f32.gmra.mxu0 %v383
        %v423 = vpop.f32.mrf.mxu0
        %v424 = vadd.f32 %v376, %v423
        %425 = vmatmul.f32.gmra.mxu0 %v386
        %v426 = vpop.f32.mrf.mxu0
        %v427 = vadd.f32 %v376, %v426
        %428 = vmatmul.f32.gmra.mxu0 %v389
        %v429 = vpop.f32.mrf.mxu0
        %v430 = vadd.f32 %v376, %v429
        %431 = vmatmul.f32.gmra.mxu0 %v392
        %v432 = vpop.f32.mrf.mxu0
        %v433 = vadd.f32 %v376, %v432
        %434 = vmatmul.f32.gmra.mxu0 %v395
        %v435 = vpop.f32.mrf.mxu0
        %v436 = vadd.f32 %v376, %v435
        %437 = vmatmul.f32.gmra.mxu0 %v398
        %v438 = vpop.f32.mrf.mxu0
        %v439 = vadd.f32 %v376, %v438
        %440 = vmatmul.f32.gmra.mxu0 %v401
        %v441 = vpop.f32.mrf.mxu0
        %v442 = vadd.f32 %v376, %v441
        %443 = vdwg.mxu0
        %v445 = vperm.slane %v369, 0
        %v448 = vsel %vm378, %v421, 0
        %v451 = vsel %vm378, %v424, 0
        %v454 = vsel %vm378, %v427, 0
        %v457 = vsel %vm378, %v430, 0
        %v460 = vsel %vm378, %v433, 0
        %v463 = vsel %vm378, %v436, 0
        %v466 = vsel %vm378, %v439, 0
        %v469 = vsel %vm378, %v442, 0
        %471 = vmatpush.msra.mxu0 0.0
        %472 = vmatpush.msra.mxu0 0.0
        %473 = vmatpush.msra.mxu0 0.0
        %474 = vmatpush.msra.mxu0 0.0
        %475 = vmatpush.msra.mxu0 0.0
        %476 = vmatpush.msra.mxu0 0.0
        %477 = vmatpush.msra.mxu0 0.0
        %478 = vmatpush.msra.mxu0 0.0
        %479 = vmatpush.msra.mxu0 0.0
        %480 = vmatpush.msra.mxu0 0.0
        %481 = vmatpush.msra.mxu0 0.0
        %482 = vmatpush.msra.mxu0 0.0
        %483 = vmatpush.msra.mxu0 %v368
        %484 = vmatpush.msra.mxu0 %v367
        %485 = vmatpush.msra.mxu0 %v366
        %486 = vmatpush.msra.mxu0 %v365
        %487 = vmatmul.f32.gmra.mxu0 %v448
        %v488 = vpop.f32.mrf.mxu0
        %v489 = vadd.f32 %v445, %v488
        %490 = vmatmul.f32.gmra.mxu0 %v451
        %v491 = vpop.f32.mrf.mxu0
        %v492 = vadd.f32 %v445, %v491
        %493 = vmatmul.f32.gmra.mxu0 %v454
        %v494 = vpop.f32.mrf.mxu0
        %v495 = vadd.f32 %v445, %v494
        %496 = vmatmul.f32.gmra.mxu0 %v457
        %v497 = vpop.f32.mrf.mxu0
        %v498 = vadd.f32 %v445, %v497
        %499 = vmatmul.f32.gmra.mxu0 %v460
        %v500 = vpop.f32.mrf.mxu0
        %v501 = vadd.f32 %v445, %v500
        %502 = vmatmul.f32.gmra.mxu0 %v463
        %v503 = vpop.f32.mrf.mxu0
        %v504 = vadd.f32 %v445, %v503
        %505 = vmatmul.f32.gmra.mxu0 %v466
        %v506 = vpop.f32.mrf.mxu0
        %v507 = vadd.f32 %v445, %v506
        %508 = vmatmul.f32.gmra.mxu0 %v469
        %v509 = vpop.f32.mrf.mxu0
        %v510 = vadd.f32 %v445, %v509
        %511 = vdwg.mxu0
        %v513 = vsel %vm378, %v489, 0
        %v516 = vsel %vm378, %v492, 0
        %518 = vmatpush.xpose.msra.mxu0 0.0
        %519 = vmatpush.xpose.msra.mxu0 0.0
        %520 = vmatpush.xpose.msra.mxu0 0.0
        %521 = vmatpush.xpose.msra.mxu0 0.0
        %522 = vmatpush.xpose.msra.mxu0 0.0
        %523 = vmatpush.xpose.msra.mxu0 0.0
        %524 = vmatpush.xpose.msra.mxu0 0.0
        %525 = vmatpush.xpose.msra.mxu0 0.0
        %526 = vmatpush.xpose.msra.mxu0 0.0
        %527 = vmatpush.xpose.msra.mxu0 0.0
        %528 = vmatpush.xpose.msra.mxu0 0.0
        %529 = vmatpush.xpose.msra.mxu0 0.0
        %530 = vmatpush.xpose.msra.mxu0 0.0
        %531 = vmatpush.xpose.msra.mxu0 0.0
        %532 = vmatpush.xpose.msra.mxu0 %v516
        %533 = vmatpush.xpose.msra.mxu0 %v513
        %534 = vmatmul.f32.gmra.mxu0 %v513
        %v535 = vpop.f32.mrf.mxu0
        %v536 = vadd.f32 0.0, %v535
        %537 = vmatmul.f32.gmra.mxu0 %v516
        %v538 = vpop.f32.mrf.mxu0
        %v539 = vadd.f32 0.0, %v538
        %540 = vdwg.mxu0
        %v542 = vsel %vm378, %v495, 0
        %v545 = vsel %vm378, %v498, 0
        %547 = vmatpush.xpose.msra.mxu0 0.0
        %548 = vmatpush.xpose.msra.mxu0 0.0
        %549 = vmatpush.xpose.msra.mxu0 0.0
        %550 = vmatpush.xpose.msra.mxu0 0.0
        %551 = vmatpush.xpose.msra.mxu0 0.0
        %552 = vmatpush.xpose.msra.mxu0 0.0
        %553 = vmatpush.xpose.msra.mxu0 0.0
        %554 = vmatpush.xpose.msra.mxu0 0.0
        %555 = vmatpush.xpose.msra.mxu0 0.0
        %556 = vmatpush.xpose.msra.mxu0 0.0
        %557 = vmatpush.xpose.msra.mxu0 0.0
        %558 = vmatpush.xpose.msra.mxu0 0.0
        %559 = vmatpush.xpose.msra.mxu0 0.0
        %560 = vmatpush.xpose.msra.mxu0 0.0
        %561 = vmatpush.xpose.msra.mxu0 %v545
        %562 = vmatpush.xpose.msra.mxu0 %v542
        %563 = vmatmul.f32.gmra.mxu0 %v542
        %v564 = vpop.f32.mrf.mxu0
        %v565 = vadd.f32 0.0, %v564
        %566 = vmatmul.f32.gmra.mxu0 %v545
        %v567 = vpop.f32.mrf.mxu0
        %v568 = vadd.f32 0.0, %v567
        %569 = vdwg.mxu0
        %v571 = vsel %vm378, %v501, 0
        %v574 = vsel %vm378, %v504, 0
        %576 = vmatpush.xpose.msra.mxu0 0.0
        %577 = vmatpush.xpose.msra.mxu0 0.0
        %578 = vmatpush.xpose.msra.mxu0 0.0
        %579 = vmatpush.xpose.msra.mxu0 0.0
        %580 = vmatpush.xpose.msra.mxu0 0.0
        %581 = vmatpush.xpose.msra.mxu0 0.0
        %582 = vmatpush.xpose.msra.mxu0 0.0
        %583 = vmatpush.xpose.msra.mxu0 0.0
        %584 = vmatpush.xpose.msra.mxu0 0.0
        %585 = vmatpush.xpose.msra.mxu0 0.0
        %586 = vmatpush.xpose.msra.mxu0 0.0
        %587 = vmatpush.xpose.msra.mxu0 0.0
        %588 = vmatpush.xpose.msra.mxu0 0.0
        %589 = vmatpush.xpose.msra.mxu0 0.0
        %590 = vmatpush.xpose.msra.mxu0 %v574
        %591 = vmatpush.xpose.msra.mxu0 %v571
        %592 = vmatmul.f32.gmra.mxu0 %v571
        %v593 = vpop.f32.mrf.mxu0
        %v594 = vadd.f32 0.0, %v593
        %595 = vmatmul.f32.gmra.mxu0 %v574
        %v596 = vpop.f32.mrf.mxu0
        %v597 = vadd.f32 0.0, %v596
        %598 = vdwg.mxu0
        %v600 = vsel %vm378, %v507, 0
        %v603 = vsel %vm378, %v510, 0
        %605 = vmatpush.xpose.msra.mxu0 0.0
        %606 = vmatpush.xpose.msra.mxu0 0.0
        %607 = vmatpush.xpose.msra.mxu0 0.0
        %608 = vmatpush.xpose.msra.mxu0 0.0
        %609 = vmatpush.xpose.msra.mxu0 0.0
        %610 = vmatpush.xpose.msra.mxu0 0.0
        %611 = vmatpush.xpose.msra.mxu0 0.0
        %612 = vmatpush.xpose.msra.mxu0 0.0
        %613 = vmatpush.xpose.msra.mxu0 0.0
        %614 = vmatpush.xpose.msra.mxu0 0.0
        %615 = vmatpush.xpose.msra.mxu0 0.0
        %616 = vmatpush.xpose.msra.mxu0 0.0
        %617 = vmatpush.xpose.msra.mxu0 0.0
        %618 = vmatpush.xpose.msra.mxu0 0.0
        %619 = vmatpush.xpose.msra.mxu0 %v603
        %620 = vmatpush.xpose.msra.mxu0 %v600
        %621 = vmatmul.f32.gmra.mxu0 %v600
        %v622 = vpop.f32.mrf.mxu0
        %v623 = vadd.f32 0.0, %v622
        %624 = vmatmul.f32.gmra.mxu0 %v603
        %v625 = vpop.f32.mrf.mxu0
        %v626 = vadd.f32 0.0, %v625
        %627 = vdwg.mxu0
        %vm628 = vcmask 130048
        %v629 = vsel %vm628, %v536, -inf
        %630 = vmax.xlane.f32.xlu0 %v629
        %v631 = vpop.xlane.xlu0 %630
        %v632 = vsel %vm628, %v539, -inf
        %633 = vmax.xlane.f32.xlu0 %v632
        %v634 = vpop.xlane.xlu0 %633
        %v635 = vsel %vm628, %v565, -inf
        %636 = vmax.xlane.f32.xlu0 %v635
        %v637 = vpop.xlane.xlu0 %636
        %v638 = vsel %vm628, %v568, -inf
        %639 = vmax.xlane.f32.xlu0 %v638
        %v640 = vpop.xlane.xlu0 %639
        %v641 = vsel %vm628, %v594, -inf
        %642 = vmax.xlane.f32.xlu0 %v641
        %v643 = vpop.xlane.xlu0 %642
        %v644 = vsel %vm628, %v597, -inf
        %645 = vmax.xlane.f32.xlu0 %v644
        %v646 = vpop.xlane.xlu0 %645
        %v647 = vsel %vm628, %v623, -inf
        %648 = vmax.xlane.f32.xlu0 %v647
        %v649 = vpop.xlane.xlu0 %648
        %v650 = vsel %vm628, %v626, -inf
        %651 = vmax.xlane.f32.xlu0 %v650
        %v652 = vpop.xlane.xlu0 %651
        %v653 = vsub.f32 %v536, %v631
        %v654 = vsub.f32 %v539, %v634
        %v655 = vsub.f32 %v565, %v637
        %v656 = vsub.f32 %v568, %v640
        %v657 = vsub.f32 %v594, %v643
        %v658 = vsub.f32 %v597, %v646
        %v659 = vsub.f32 %v623, %v649
        %v660 = vsub.f32 %v626, %v652
        %v661 = vmul.f32 %v653, 1.442695
        %v662 = vpow.pop %v661
        %v663 = vmul.f32 %v654, 1.442695
        %v664 = vpow.pop %v663
        %v665 = vmul.f32 %v655, 1.442695
        %v666 = vpow.pop %v665
        %v667 = vmul.f32 %v656, 1.442695
        %v668 = vpow.pop %v667
        %v669 = vmul.f32 %v657, 1.442695
        %v670 = vpow.pop %v669
        %v671 = vmul.f32 %v658, 1.442695
        %v672 = vpow.pop %v671
        %v673 = vmul.f32 %v659, 1.442695
        %v674 = vpow.pop %v673
        %v675 = vmul.f32 %v660, 1.442695
        %v676 = vpow.pop %v675
        %v677 = vsel %vm628, %v662, 0.0
        %678 = vadd.xlane.f32.xlu0 %v677
        %v679 = vpop.xlane.xlu0 %678
        %v680 = vsel %vm628, %v664, 0.0
        %681 = vadd.xlane.f32.xlu0 %v680
        %v682 = vpop.xlane.xlu0 %681
        %v683 = vsel %vm628, %v666, 0.0
        %684 = vadd.xlane.f32.xlu0 %v683
        %v685 = vpop.xlane.xlu0 %684
        %v686 = vsel %vm628, %v668, 0.0
        %687 = vadd.xlane.f32.xlu0 %v686
        %v688 = vpop.xlane.xlu0 %687
        %v689 = vsel %vm628, %v670, 0.0
        %690 = vadd.xlane.f32.xlu0 %v689
        %v691 = vpop.xlane.xlu0 %690
        %v692 = vsel %vm628, %v672, 0.0
        %693 = vadd.xlane.f32.xlu0 %v692
        %v694 = vpop.xlane.xlu0 %693
        %v695 = vsel %vm628, %v674, 0.0
        %696 = vadd.xlane.f32.xlu0 %v695
        %v697 = vpop.xlane.xlu0 %696
        %v698 = vsel %vm628, %v676, 0.0
        %699 = vadd.xlane.f32.xlu0 %v698
        %v700 = vpop.xlane.xlu0 %699
        %v701 = vrcp.pop %v679
        %v702 = vmul.f32 %v679, %v701
        %v703 = vsub.f32 1.0, %v702
        %v704 = vmul.f32 %v701, %v703
        %v705 = vadd.f32 %v701, %v704
        %vm706 = vweird.f32 %v679
        %vm707 = vweird.f32 %v701
        %vm708 = vmor %vm706, %vm707
        %v709 = vsel %vm708, %v701, %v705
        %v710 = vand.u32 2147483647, %v679
        %vm711 = vcmp.eq.f32.partialorder %v710, 8.507059e+37
        %v712 = vand.u32 %v679, 2147483648
        %v713 = vor.u32 1.1754944e-38, %v712
        %v714 = vsel %vm711, %v713, %v709
        %v715 = vrcp.pop %v682
        %v716 = vmul.f32 %v682, %v715
        %v717 = vsub.f32 1.0, %v716
        %v718 = vmul.f32 %v715, %v717
        %v719 = vadd.f32 %v715, %v718
        %vm720 = vweird.f32 %v682
        %vm721 = vweird.f32 %v715
        %vm722 = vmor %vm720, %vm721
        %v723 = vsel %vm722, %v715, %v719
        %v724 = vand.u32 2147483647, %v682
        %vm725 = vcmp.eq.f32.partialorder %v724, 8.507059e+37
        %v726 = vand.u32 %v682, 2147483648
        %v727 = vor.u32 1.1754944e-38, %v726
        %v728 = vsel %vm725, %v727, %v723
        %v729 = vrcp.pop %v685
        %v730 = vmul.f32 %v685, %v729
        %v731 = vsub.f32 1.0, %v730
        %v732 = vmul.f32 %v729, %v731
        %v733 = vadd.f32 %v729, %v732
        %vm734 = vweird.f32 %v685
        %vm735 = vweird.f32 %v729
        %vm736 = vmor %vm734, %vm735
        %v737 = vsel %vm736, %v729, %v733
        %v738 = vand.u32 2147483647, %v685
        %vm739 = vcmp.eq.f32.partialorder %v738, 8.507059e+37
        %v740 = vand.u32 %v685, 2147483648
        %v741 = vor.u32 1.1754944e-38, %v740
        %v742 = vsel %vm739, %v741, %v737
        %v743 = vrcp.pop %v688
        %v744 = vmul.f32 %v688, %v743
        %v745 = vsub.f32 1.0, %v744
        %v746 = vmul.f32 %v743, %v745
        %v747 = vadd.f32 %v743, %v746
        %vm748 = vweird.f32 %v688
        %vm749 = vweird.f32 %v743
        %vm750 = vmor %vm748, %vm749
        %v751 = vsel %vm750, %v743, %v747
        %v752 = vand.u32 2147483647, %v688
        %vm753 = vcmp.eq.f32.partialorder %v752, 8.507059e+37
        %v754 = vand.u32 %v688, 2147483648
        %v755 = vor.u32 1.1754944e-38, %v754
        %v756 = vsel %vm753, %v755, %v751
        %v757 = vrcp.pop %v691
        %v758 = vmul.f32 %v691, %v757
        %v759 = vsub.f32 1.0, %v758
        %v760 = vmul.f32 %v757, %v759
        %v761 = vadd.f32 %v757, %v760
        %vm762 = vweird.f32 %v691
        %vm763 = vweird.f32 %v757
        %vm764 = vmor %vm762, %vm763
        %v765 = vsel %vm764, %v757, %v761
        %v766 = vand.u32 2147483647, %v691
        %vm767 = vcmp.eq.f32.partialorder %v766, 8.507059e+37
        %v768 = vand.u32 %v691, 2147483648
        %v769 = vor.u32 1.1754944e-38, %v768
        %v770 = vsel %vm767, %v769, %v765
        %v771 = vrcp.pop %v694
        %v772 = vmul.f32 %v694, %v771
        %v773 = vsub.f32 1.0, %v772
        %v774 = vmul.f32 %v771, %v773
        %v775 = vadd.f32 %v771, %v774
        %vm776 = vweird.f32 %v694
        %vm777 = vweird.f32 %v771
        %vm778 = vmor %vm776, %vm777
        %v779 = vsel %vm778, %v771, %v775
        %v780 = vand.u32 2147483647, %v694
        %vm781 = vcmp.eq.f32.partialorder %v780, 8.507059e+37
        %v782 = vand.u32 %v694, 2147483648
        %v783 = vor.u32 1.1754944e-38, %v782
        %v784 = vsel %vm781, %v783, %v779
        %v785 = vrcp.pop %v697
        %v786 = vmul.f32 %v697, %v785
        %v787 = vsub.f32 1.0, %v786
        %v788 = vmul.f32 %v785, %v787
        %v789 = vadd.f32 %v785, %v788
        %vm790 = vweird.f32 %v697
        %vm791 = vweird.f32 %v785
        %vm792 = vmor %vm790, %vm791
        %v793 = vsel %vm792, %v785, %v789
        %v794 = vand.u32 2147483647, %v697
        %vm795 = vcmp.eq.f32.partialorder %v794, 8.507059e+37
        %v796 = vand.u32 %v697, 2147483648
        %v797 = vor.u32 1.1754944e-38, %v796
        %v798 = vsel %vm795, %v797, %v793
        %v799 = vrcp.pop %v700
        %v800 = vmul.f32 %v700, %v799
        %v801 = vsub.f32 1.0, %v800
        %v802 = vmul.f32 %v799, %v801
        %v803 = vadd.f32 %v799, %v802
        %vm804 = vweird.f32 %v700
        %vm805 = vweird.f32 %v799
        %vm806 = vmor %vm804, %vm805
        %v807 = vsel %vm806, %v799, %v803
        %v808 = vand.u32 2147483647, %v700
        %vm809 = vcmp.eq.f32.partialorder %v808, 8.507059e+37
        %v810 = vand.u32 %v700, 2147483648
        %v811 = vor.u32 1.1754944e-38, %v810
        %v812 = vsel %vm809, %v811, %v807
        %v813 = vmul.f32 %v662, %v714
        %v814 = vmul.f32 %v664, %v728
        %v815 = vmul.f32 %v666, %v742
        %v816 = vmul.f32 %v668, %v756
        %v817 = vmul.f32 %v670, %v770
        %v818 = vmul.f32 %v672, %v784
        %v819 = vmul.f32 %v674, %v798
        %v820 = vmul.f32 %v676, %v812
        %v821 = vsel %vm628, %v813, 0.0
        %822 = vadd.xlane.f32.xlu0 %v821
        %v823 = vpop.xlane.xlu0 %822
        %v824 = vsel %vm628, %v814, 0.0
        %825 = vadd.xlane.f32.xlu0 %v824
        %v826 = vpop.xlane.xlu0 %825
        %v827 = vsel %vm628, %v815, 0.0
        %828 = vadd.xlane.f32.xlu0 %v827
        %v829 = vpop.xlane.xlu0 %828
        %v830 = vsel %vm628, %v816, 0.0
        %831 = vadd.xlane.f32.xlu0 %v830
        %v832 = vpop.xlane.xlu0 %831
        %v833 = vsel %vm628, %v817, 0.0
        %834 = vadd.xlane.f32.xlu0 %v833
        %v835 = vpop.xlane.xlu0 %834
        %v836 = vsel %vm628, %v818, 0.0
        %837 = vadd.xlane.f32.xlu0 %v836
        %v838 = vpop.xlane.xlu0 %837
        %v839 = vsel %vm628, %v819, 0.0
        %840 = vadd.xlane.f32.xlu0 %v839
        %v841 = vpop.xlane.xlu0 %840
        %v842 = vsel %vm628, %v820, 0.0
        %843 = vadd.xlane.f32.xlu0 %v842
        %v844 = vpop.xlane.xlu0 %843
        %v845 = vadd.f32 %v823, 1.0
        %v846 = vadd.f32 %v826, 1.0
        %v847 = vadd.f32 %v829, 1.0
        %v848 = vadd.f32 %v832, 1.0
        %v849 = vadd.f32 %v835, 1.0
        %v850 = vadd.f32 %v838, 1.0
        %v851 = vadd.f32 %v841, 1.0
        %v852 = vadd.f32 %v844, 1.0
        %v853 = vrsqrt.pop %v845
        %v854 = vmul.f32 %v853, %v845
        %v855 = vmul.f32 %v854, %v853
        %v856 = vmul.f32 0.5, %v855
        %v857 = vsub.f32 1.5, %v856
        %v858 = vmul.f32 %v853, %v857
        %vm859 = vweird.f32 %v845
        %vm860 = vweird.f32 %v853
        %vm861 = vmor %vm859, %vm860
        %v862 = vsel %vm861, %v853, %v858
        %v863 = vrsqrt.pop %v846
        %v864 = vmul.f32 %v863, %v846
        %v865 = vmul.f32 %v864, %v863
        %v866 = vmul.f32 0.5, %v865
        %v867 = vsub.f32 1.5, %v866
        %v868 = vmul.f32 %v863, %v867
        %vm869 = vweird.f32 %v846
        %vm870 = vweird.f32 %v863
        %vm871 = vmor %vm869, %vm870
        %v872 = vsel %vm871, %v863, %v868
        %v873 = vrsqrt.pop %v847
        %v874 = vmul.f32 %v873, %v847
        %v875 = vmul.f32 %v874, %v873
        %v876 = vmul.f32 0.5, %v875
        %v877 = vsub.f32 1.5, %v876
        %v878 = vmul.f32 %v873, %v877
        %vm879 = vweird.f32 %v847
        %vm880 = vweird.f32 %v873
        %vm881 = vmor %vm879, %vm880
        %v882 = vsel %vm881, %v873, %v878
        %v883 = vrsqrt.pop %v848
        %v884 = vmul.f32 %v883, %v848
        %v885 = vmul.f32 %v884, %v883
        %v886 = vmul.f32 0.5, %v885
        %v887 = vsub.f32 1.5, %v886
        %v888 = vmul.f32 %v883, %v887
        %vm889 = vweird.f32 %v848
        %vm890 = vweird.f32 %v883
        %vm891 = vmor %vm889, %vm890
        %v892 = vsel %vm891, %v883, %v888
        %v893 = vrsqrt.pop %v849
        %v894 = vmul.f32 %v893, %v849
        %v895 = vmul.f32 %v894, %v893
        %v896 = vmul.f32 0.5, %v895
        %v897 = vsub.f32 1.5, %v896
        %v898 = vmul.f32 %v893, %v897
        %vm899 = vweird.f32 %v849
        %vm900 = vweird.f32 %v893
        %vm901 = vmor %vm899, %vm900
        %v902 = vsel %vm901, %v893, %v898
        %v903 = vrsqrt.pop %v850
        %v904 = vmul.f32 %v903, %v850
        %v905 = vmul.f32 %v904, %v903
        %v906 = vmul.f32 0.5, %v905
        %v907 = vsub.f32 1.5, %v906
        %v908 = vmul.f32 %v903, %v907
        %vm909 = vweird.f32 %v850
        %vm910 = vweird.f32 %v903
        %vm911 = vmor %vm909, %vm910
        %v912 = vsel %vm911, %v903, %v908
        %v913 = vrsqrt.pop %v851
        %v914 = vmul.f32 %v913, %v851
        %v915 = vmul.f32 %v914, %v913
        %v916 = vmul.f32 0.5, %v915
        %v917 = vsub.f32 1.5, %v916
        %v918 = vmul.f32 %v913, %v917
        %vm919 = vweird.f32 %v851
        %vm920 = vweird.f32 %v913
        %vm921 = vmor %vm919, %vm920
        %v922 = vsel %vm921, %v913, %v918
        %v923 = vrsqrt.pop %v852
        %v924 = vmul.f32 %v923, %v852
        %v925 = vmul.f32 %v924, %v923
        %v926 = vmul.f32 0.5, %v925
        %v927 = vsub.f32 1.5, %v926
        %v928 = vmul.f32 %v923, %v927
        %vm929 = vweird.f32 %v852
        %vm930 = vweird.f32 %v923
        %vm931 = vmor %vm929, %vm930
        %v932 = vsel %vm931, %v923, %v928
        %v933 = vmul.f32 %v862, %v352
        %v934 = vmul.f32 %v872, %v353
        %v935 = vmul.f32 %v882, %v354
        %v936 = vmul.f32 %v892, %v355
        %v937 = vmul.f32 %v902, %v356
        %v938 = vmul.f32 %v912, %v357
        %v939 = vmul.f32 %v922, %v358
        %v940 = vmul.f32 %v932, %v359
        %v942 = vsel %vm628, %v813, 0
        %v945 = vsel %vm628, %v814, 0
        %947 = vmatpush.msra.mxu0 0.0
        %948 = vmatpush.msra.mxu0 0.0
        %949 = vmatpush.msra.mxu0 0.0
        %950 = vmatpush.msra.mxu0 0.0
        %951 = vmatpush.msra.mxu0 0.0
        %952 = vmatpush.msra.mxu0 0.0
        %953 = vmatpush.msra.mxu0 0.0
        %954 = vmatpush.msra.mxu0 0.0
        %955 = vmatpush.msra.mxu0 0.0
        %956 = vmatpush.msra.mxu0 0.0
        %957 = vmatpush.msra.mxu0 0.0
        %958 = vmatpush.msra.mxu0 0.0
        %959 = vmatpush.msra.mxu0 0.0
        %960 = vmatpush.msra.mxu0 0.0
        %961 = vmatpush.msra.mxu0 %v934
        %962 = vmatpush.msra.mxu0 %v933
        %963 = vmatmul.f32.gmra.mxu0 %v942
        %v964 = vpop.f32.mrf.mxu0
        %v965 = vadd.f32 %v933, %v964
        %966 = vmatmul.f32.gmra.mxu0 %v945
        %v967 = vpop.f32.mrf.mxu0
        %v968 = vadd.f32 %v934, %v967
        %969 = vdwg.mxu0
        %v971 = vsel %vm628, %v815, 0
        %v974 = vsel %vm628, %v816, 0
        %976 = vmatpush.msra.mxu0 0.0
        %977 = vmatpush.msra.mxu0 0.0
        %978 = vmatpush.msra.mxu0 0.0
        %979 = vmatpush.msra.mxu0 0.0
        %980 = vmatpush.msra.mxu0 0.0
        %981 = vmatpush.msra.mxu0 0.0
        %982 = vmatpush.msra.mxu0 0.0
        %983 = vmatpush.msra.mxu0 0.0
        %984 = vmatpush.msra.mxu0 0.0
        %985 = vmatpush.msra.mxu0 0.0
        %986 = vmatpush.msra.mxu0 0.0
        %987 = vmatpush.msra.mxu0 0.0
        %988 = vmatpush.msra.mxu0 0.0
        %989 = vmatpush.msra.mxu0 0.0
        %990 = vmatpush.msra.mxu0 %v936
        %991 = vmatpush.msra.mxu0 %v935
        %992 = vmatmul.f32.gmra.mxu0 %v971
        %v993 = vpop.f32.mrf.mxu0
        %v994 = vadd.f32 %v935, %v993
        %995 = vmatmul.f32.gmra.mxu0 %v974
        %v996 = vpop.f32.mrf.mxu0
        %v997 = vadd.f32 %v936, %v996
        %998 = vdwg.mxu0
        %v1000 = vsel %vm628, %v817, 0
        %v1003 = vsel %vm628, %v818, 0
        %1005 = vmatpush.msra.mxu0 0.0
        %1006 = vmatpush.msra.mxu0 0.0
        %1007 = vmatpush.msra.mxu0 0.0
        %1008 = vmatpush.msra.mxu0 0.0
        %1009 = vmatpush.msra.mxu0 0.0
        %1010 = vmatpush.msra.mxu0 0.0
        %1011 = vmatpush.msra.mxu0 0.0
        %1012 = vmatpush.msra.mxu0 0.0
        %1013 = vmatpush.msra.mxu0 0.0
        %1014 = vmatpush.msra.mxu0 0.0
        %1015 = vmatpush.msra.mxu0 0.0
        %1016 = vmatpush.msra.mxu0 0.0
        %1017 = vmatpush.msra.mxu0 0.0
        %1018 = vmatpush.msra.mxu0 0.0
        %1019 = vmatpush.msra.mxu0 %v938
        %1020 = vmatpush.msra.mxu0 %v937
        %1021 = vmatmul.f32.gmra.mxu0 %v1000
        %v1022 = vpop.f32.mrf.mxu0
        %v1023 = vadd.f32 %v937, %v1022
        %1024 = vmatmul.f32.gmra.mxu0 %v1003
        %v1025 = vpop.f32.mrf.mxu0
        %v1026 = vadd.f32 %v938, %v1025
        %1027 = vdwg.mxu0
        %v1029 = vsel %vm628, %v819, 0
        %v1032 = vsel %vm628, %v820, 0
        %1034 = vmatpush.msra.mxu0 0.0
        %1035 = vmatpush.msra.mxu0 0.0
        %1036 = vmatpush.msra.mxu0 0.0
        %1037 = vmatpush.msra.mxu0 0.0
        %1038 = vmatpush.msra.mxu0 0.0
        %1039 = vmatpush.msra.mxu0 0.0
        %1040 = vmatpush.msra.mxu0 0.0
        %1041 = vmatpush.msra.mxu0 0.0
        %1042 = vmatpush.msra.mxu0 0.0
        %1043 = vmatpush.msra.mxu0 0.0
        %1044 = vmatpush.msra.mxu0 0.0
        %1045 = vmatpush.msra.mxu0 0.0
        %1046 = vmatpush.msra.mxu0 0.0
        %1047 = vmatpush.msra.mxu0 0.0
        %1048 = vmatpush.msra.mxu0 %v940
        %1049 = vmatpush.msra.mxu0 %v939
        %1050 = vmatmul.f32.gmra.mxu0 %v1029
        %v1051 = vpop.f32.mrf.mxu0
        %v1052 = vadd.f32 %v939, %v1051
        %1053 = vmatmul.f32.gmra.mxu0 %v1032
        %v1054 = vpop.f32.mrf.mxu0
        %v1055 = vadd.f32 %v940, %v1054
        %1056 = vdwg.mxu0
        %v1057 = vmul.f32 %v862, %v965
        %v1058 = vmul.f32 %v872, %v968
        %v1059 = vmul.f32 %v882, %v994
        %v1060 = vmul.f32 %v892, %v997
        %v1061 = vmul.f32 %v902, %v1023
        %v1062 = vmul.f32 %v912, %v1026
        %v1063 = vmul.f32 %v922, %v1052
        %v1064 = vmul.f32 %v932, %v1055
        %v1066 = vperm.slane %v374, 0
        %v1069 = vsel %vm378, %v1057, 0
        %v1072 = vsel %vm378, %v1058, 0
        %v1075 = vsel %vm378, %v1059, 0
        %v1078 = vsel %vm378, %v1060, 0
        %v1081 = vsel %vm378, %v1061, 0
        %v1084 = vsel %vm378, %v1062, 0
        %v1087 = vsel %vm378, %v1063, 0
        %v1090 = vsel %vm378, %v1064, 0
        %1092 = vmatpush.msra.mxu0 0.0
        %1093 = vmatpush.msra.mxu0 0.0
        %1094 = vmatpush.msra.mxu0 0.0
        %1095 = vmatpush.msra.mxu0 0.0
        %1096 = vmatpush.msra.mxu0 0.0
        %1097 = vmatpush.msra.mxu0 0.0
        %1098 = vmatpush.msra.mxu0 0.0
        %1099 = vmatpush.msra.mxu0 0.0
        %1100 = vmatpush.msra.mxu0 0.0
        %1101 = vmatpush.msra.mxu0 0.0
        %1102 = vmatpush.msra.mxu0 0.0
        %1103 = vmatpush.msra.mxu0 0.0
        %1104 = vmatpush.msra.mxu0 %v373
        %1105 = vmatpush.msra.mxu0 %v372
        %1106 = vmatpush.msra.mxu0 %v371
        %1107 = vmatpush.msra.mxu0 %v370
        %1108 = vmatmul.f32.gmra.mxu0 %v1069
        %v1109 = vpop.f32.mrf.mxu0
        %v1110 = vadd.f32 %v1066, %v1109
        %1111 = vmatmul.f32.gmra.mxu0 %v1072
        %v1112 = vpop.f32.mrf.mxu0
        %v1113 = vadd.f32 %v1066, %v1112
        %1114 = vmatmul.f32.gmra.mxu0 %v1075
        %v1115 = vpop.f32.mrf.mxu0
        %v1116 = vadd.f32 %v1066, %v1115
        %1117 = vmatmul.f32.gmra.mxu0 %v1078
        %v1118 = vpop.f32.mrf.mxu0
        %v1119 = vadd.f32 %v1066, %v1118
        %1120 = vmatmul.f32.gmra.mxu0 %v1081
        %v1121 = vpop.f32.mrf.mxu0
        %v1122 = vadd.f32 %v1066, %v1121
        %1123 = vmatmul.f32.gmra.mxu0 %v1084
        %v1124 = vpop.f32.mrf.mxu0
        %v1125 = vadd.f32 %v1066, %v1124
        %1126 = vmatmul.f32.gmra.mxu0 %v1087
        %v1127 = vpop.f32.mrf.mxu0
        %v1128 = vadd.f32 %v1066, %v1127
        %1129 = vmatmul.f32.gmra.mxu0 %v1090
        %v1130 = vpop.f32.mrf.mxu0
        %v1131 = vadd.f32 %v1066, %v1130
        %1132 = vdwg.mxu0
        %v1133 = vmax.f32 %v1110, 0.0
        %v1134 = vmax.f32 %v1113, 0.0
        %v1135 = vmax.f32 %v1116, 0.0
        %v1136 = vmax.f32 %v1119, 0.0
        %v1137 = vmax.f32 %v1122, 0.0
        %v1138 = vmax.f32 %v1125, 0.0
        %v1139 = vmax.f32 %v1128, 0.0
        %v1140 = vmax.f32 %v1131, 0.0
        %1141 = vst.msk [vmem:[%s349] sm:$0xff] %vm378, %v1133
        %1142 = vst.msk [vmem:[%s349 + $0x8] sm:$0xff] %vm378, %v1134
        %1143 = vst.msk [vmem:[%s349 + $0x10] sm:$0xff] %vm378, %v1135
        %1144 = vst.msk [vmem:[%s349 + $0x18] sm:$0xff] %vm378, %v1136
        %1145 = vst.msk [vmem:[%s349 + $0x20] sm:$0xff] %vm378, %v1137
        %1146 = vst.msk [vmem:[%s349 + $0x28] sm:$0xff] %vm378, %v1138
        %1147 = vst.msk [vmem:[%s349 + $0x30] sm:$0xff] %vm378, %v1139
        %1148 = vst.msk [vmem:[%s349 + $0x38] sm:$0xff] %vm378, %v1140
        %s1149 = sand.u32 %s186, 1
        %s1150 = scalar_lea.sflag [#allocation4], %s1149
        %s1151 = sand.u32 %s186, 1
        %s1152 = smul.addr %s1151, 64
        %s1153 = scalar_lea.vmem [#allocation10], %s1152
        // Predicated region
        $region65: #{tpu_custom_call.1} parent=47 // pred_check
          %p1154 = pneg %p196
        $region66: #{tpu_custom_call.1} parent=47 // pred_check_branch
          %1156 = sbr.rel (%p1154) target = $region68
        $region67: #{tpu_custom_call.1} parent=47 // pred_region
          %s1157 = smul.u32 4, %s26
          %1159 = vsyncadd %s1150, 0
          %s1160 = smul.addr %s1157, 2
          %s1161 = smul.addr %s1160, 8
          %s1162 = scalar_lea.hbm %s7, %s1161
          %s1163 = sshll.u32 %s1153, 4
          %s1164 = int_to_ptr.vmem [resolvable:$true] %s1163
          %s1165 = sshll.u32 %s1162, 4
          %s1166 = int_to_ptr.hbm [resolvable:$true] %s1165
          %1171 = dma.vmem_to_hbm [thread:$0]  %s1164, 1024, %s1166, %s1150, 128, 128, 8
        $region68: #{tpu_custom_call.1} parent=47 // pred_fallthru
          _
      $region48: #{tpu_custom_call.1} parent=5 // pred_fallthru
        _
      %p1172 = scmp.le.s32.totalorder 2, %s21
      // Predicated region
      $region69: #{tpu_custom_call.1} parent=5 // pred_check
        %p1173 = pneg %p1172
      $region70: #{tpu_custom_call.1} parent=5 // pred_check_branch
        %1175 = sbr.rel (%p1173) target = $region72
      $region71: #{tpu_custom_call.1} parent=5 // pred_region
        %s1176 = ssub.s32 %s21, 2
        // Predicated region
        $region73: #{tpu_custom_call.1} parent=71 // pred_check
          %p1177 = pneg %p202
        $region74: #{tpu_custom_call.1} parent=71 // pred_check_branch
          %1179 = sbr.rel (%p1177) target = $region76
        $region75: #{tpu_custom_call.1} parent=71 // pred_region
          %s1180 = sand.u32 %s187, 1
          %s1181 = scalar_lea.sflag [#allocation4], %s1180
          %s1182 = sand.u32 %s187, 1
          %s1183 = smul.addr %s1182, 64
          %s1184 = scalar_lea.vmem [#allocation10], %s1183
          %1186 = dma.done %s1181, 1024
        $region76: #{tpu_custom_call.1} parent=71 // pred_fallthru
          _
      $region72: #{tpu_custom_call.1} parent=5 // pred_fallthru
        _
    $region6: #{tpu_custom_call.1} parent=1 // loop_footer
      %s25 = sadd.s32 1, %s21
    $region7: #{tpu_custom_call.1} parent=1 // loop_footer_branch
      %20 = sbr.rel target = $region3
    $region8: #{tpu_custom_call.1} parent=1 // loop_exit
      _
    %1187 = vsyncpa [#allocation3], 1
    %s1188 = scalar_lea.sflag [#allocation3], 1
    %1189 = vsyncpa %s1188, 1
    %1190 = vsyncpa [#allocation6], 1
    %1191 = vsyncpa [#allocation9], 1
    %1192 = vsyncpa [#allocation4], 1
    %s1193 = scalar_lea.sflag [#allocation4], 1
    %1194 = vsyncpa %s1193, 1

</llo_original>
